<compile_context>
chip_gen: v7x
topology: tpu7x:2x2x1
jax: 0.10.0
libtpu: 0.0.40
codegen_flags: <defaults>
</compile_context>

<pallas_src>
import functools

import jax
import jax.numpy as jnp
from jax.experimental import pallas as pl
from jax.experimental.pallas import tpu as pltpu


def _patch_embed_kernel(p_ref, w_ref, b_ref, g_ref, beta_ref, o_ref):
    # p_ref   : (TM, K)  streamed patch tile (bf16 or f32)
    # w_ref   : (K,  E)  projection weight, resident across the grid
    # b_ref   : (1,  E)  projection bias   (f32)
    # g_ref   : (1,  E)  LayerNorm gamma   (f32)
    # beta_ref: (1,  E)  LayerNorm beta    (f32)
    # o_ref   : (TM, E)  output tile (out_dtype, default bf16)
    y = jnp.dot(p_ref[...], w_ref[...], preferred_element_type=jnp.float32)
    y = y + b_ref[...]                        # broadcast (1, E) over rows

    # LayerNorm over embed_dim: biased variance, eps=1e-5 (torch defaults), all f32.
    mean = jnp.mean(y, axis=-1, keepdims=True)
    centered = y - mean
    var = jnp.mean(centered * centered, axis=-1, keepdims=True)
    inv = jax.lax.rsqrt(var + 1e-5)           # EUP slot; VALU/XLU have slack here
    y = centered * inv * g_ref[...] + beta_ref[...]
    o_ref[...] = y.astype(o_ref.dtype)


def _round_up(x, m):
    return ((x + m - 1) // m) * m


def _generation_params():
    """(vmem_limit_bytes, row_tile_target) per TPU generation; conservative fallback."""
    try:
        vmem_cap = pltpu.get_tpu_info().vmem_capacity_bytes
    except Exception:
        vmem_cap = 0
    if vmem_cap >= 100 * 1024 * 1024:         # v5e / v6e: 128 MiB physical VMEM
        return 64 * 1024 * 1024, 1024         # larger tiles amortize per-step overhead
    return 48 * 1024 * 1024, 512              # v7x (64 MiB physical) / unknown: headroom


def _choose_block_m(M, target):
    """Row-tile size. Large M: multiples of 128 (floor 256, cap `target`); the caller
    pads M up to a multiple of the tile (never hunt for small exact divisors). Small M:
    split into >= 2 tiles so both v7x TensorCores get work (harmless on v5e/v6e)."""
    if M <= 256:
        if M <= 16:
            return _round_up(M, 8)
        return _round_up(-(-M // 2), 8)
    tm = max(256, (min(target, 1024) // 128) * 128)
    if -(-M // tm) < 2:                        # guarantee >= 2 grid blocks
        tm = max(128, _round_up(-(-M // 2), 128))
    return tm


def patch_embed_forward(x, proj_w, proj_b, ln_gamma, ln_beta, patch_size, *,
                        compute_dtype=jnp.bfloat16, out_dtype=jnp.bfloat16,
                        block_m=None):
    """x: (B, C, H, W) NCHW.  Returns ((B, N, E) in out_dtype, (H', W'))."""
    B, C, H, W = x.shape
    ph, pw = patch_size
    Hp, Wp = H // ph, W // pw
    N = Hp * Wp
    E = proj_w.shape[0]
    K = C * ph * pw
    M = B * N

    # Patch extraction (layout glue; see TODO(synk) at the top). The bf16 cast is fused
    # by XLA into the transpose, so P is written once at half the bytes of f32.
    patches = x.reshape(B, C, Hp, ph, Wp, pw)
    patches = jnp.transpose(patches, (0, 2, 4, 1, 3, 5)).reshape(M, K)
    patches = patches.astype(compute_dtype)

    # Conv weight (E, C, ph, pw) -> (K, E); resident in VMEM across the grid.
    w2d = jnp.transpose(proj_w.reshape(E, K), (1, 0)).astype(compute_dtype)

    # Bias / LayerNorm params stay f32 (the elementwise tail runs in f32).
    b2d = proj_b.astype(jnp.float32).reshape(1, E)
    g2d = ln_gamma.astype(jnp.float32).reshape(1, E)
    beta2d = ln_beta.astype(jnp.float32).reshape(1, E)

    vmem_limit, tile_target = _generation_params()
    if block_m is None:
        tm = _choose_block_m(M, tile_target)
    else:
        tm = max(8, _round_up(int(block_m), 8))   # validate user tile: multiple of 8
    tm = min(tm, _round_up(M, 8))
    grid_m = pl.cdiv(M, tm)
    M_pad = grid_m * tm
    if M_pad != M:
        # Ragged last tile: pad rows with zeros (safe through LN thanks to eps);
        # padded rows are sliced off below and never reach the caller.
        patches = jnp.pad(patches, ((0, M_pad - M), (0, 0)))

    in_bytes = jnp.dtype(compute_dtype).itemsize
    out_bytes = jnp.dtype(out_dtype).itemsize
    cost = pl.CostEstimate(
        flops=2 * M_pad * K * E + 6 * M_pad * E,
        transcendentals=M_pad,                    # one rsqrt per row
        bytes_accessed=(M_pad * K + K * E) * in_bytes
        + M_pad * E * out_bytes + 3 * E * 4,
    )

    out = pl.pallas_call(
        _patch_embed_kernel,
        out_shape=jax.ShapeDtypeStruct((M_pad, E), out_dtype),
        grid_spec=pltpu.PrefetchScalarGridSpec(
            num_scalar_prefetch=0,
            grid=(grid_m,),
            in_specs=[
                pl.BlockSpec((tm, K), lambda i: (i, 0)),   # streamed patch tile
                pl.BlockSpec((K, E), lambda i: (0, 0)),    # resident weight
                pl.BlockSpec((1, E), lambda i: (0, 0)),    # resident bias
                pl.BlockSpec((1, E), lambda i: (0, 0)),    # resident gamma
                pl.BlockSpec((1, E), lambda i: (0, 0)),    # resident beta
            ],
            out_specs=pl.BlockSpec((tm, E), lambda i: (i, 0)),
        ),
        compiler_params=pltpu.CompilerParams(
            dimension_semantics=("parallel",),  # rows independent -> megacore/2-TC shardable
            vmem_limit_bytes=vmem_limit,
        ),
        cost_estimate=cost,
    )(patches, w2d, b2d, g2d, beta2d)

    if M_pad != M:
        out = out[:M]
    return out.reshape(B, N, E), (Hp, Wp)


def _reference(x, proj_w, proj_b, ln_gamma, ln_beta, patch_size):
    # Pure-JAX reference of the PyTorch forward, for a sanity check.
    ph, pw = patch_size
    y = jax.lax.conv_general_dilated(
        x, proj_w, window_strides=(ph, pw), padding="VALID",
        dimension_numbers=("NCHW", "OIHW", "NCHW"))
    y = y + proj_b.reshape(1, -1, 1, 1)
    B_, E, Hp, Wp = y.shape
    y = y.reshape(B_, E, Hp * Wp).transpose(0, 2, 1)
    mean = jnp.mean(y, axis=-1, keepdims=True)
    var = jnp.mean((y - mean) ** 2, axis=-1, keepdims=True)
    y = (y - mean) / jnp.sqrt(var + 1e-5)
    y = y * ln_gamma + ln_beta
    return y, (Hp, Wp)


if __name__ == "__main__":
    # Small shapes consistent with the module: img 16x16, patch 4, C=4, E=128.
    B, C, IMG, P, E = 2, 4, 16, 4, 128
    key = jax.random.PRNGKey(0)
    kx, kw, kb, kg = jax.random.split(key, 4)

    x = jax.random.normal(kx, (B, C, IMG, IMG), dtype=jnp.float32)
    proj_w = 0.02 * jax.random.normal(kw, (E, C, P, P), dtype=jnp.float32)
    proj_b = 0.01 * jax.random.normal(kb, (E,), dtype=jnp.float32)
    ln_gamma = 1.0 + 0.1 * jax.random.normal(kg, (E,), dtype=jnp.float32)
    ln_beta = 0.05 * jnp.ones((E,), dtype=jnp.float32)

    ref, (Hr, Wr) = _reference(x, proj_w, proj_b, ln_gamma, ln_beta, (P, P))
    N = (IMG // P) ** 2

    # Default fast path: bf16 streamed operands, bf16 output, auto tile
    # (M=32 -> two 16-row tiles, exercising the multi-block pipelined path).
    fwd_fast = jax.jit(functools.partial(patch_embed_forward, patch_size=(P, P)))
    out_fast, (Hp, Wp) = fwd_fast(x, proj_w, proj_b, ln_gamma, ln_beta)
    out_fast = jax.block_until_ready(out_fast)
    assert out_fast.shape == (B, N, E), out_fast.shape
    assert out_fast.dtype == jnp.bfloat16, out_fast.dtype
    assert (Hp, Wp) == (Hr, Wr) == (IMG // P, IMG // P)
    err_fast = float(jnp.max(jnp.abs(out_fast.astype(jnp.float32) - ref)))
    assert jnp.allclose(out_fast.astype(jnp.float32), ref,
                        atol=5e-2, rtol=5e-2), err_fast

    # Full-f32 path (compute + output): strict numerical check against the reference.
    fwd_f32 = jax.jit(functools.partial(
        patch_embed_forward, patch_size=(P, P),
        compute_dtype=jnp.float32, out_dtype=jnp.float32, block_m=8))
    out_f32, _ = fwd_f32(x, proj_w, proj_b, ln_gamma, ln_beta)
    out_f32 = jax.block_until_ready(out_f32)
    err_f32 = float(jnp.max(jnp.abs(out_f32 - ref)))
    assert jnp.allclose(out_f32, ref, atol=1e-4, rtol=1e-4), err_f32

    print("KERNEL_OK")
</pallas_src>

<mosaic_0001>
module attributes {stable_mosaic.version = 11 : i64} {
  func.func @_patch_embed_kernel(%arg0: i32, %arg1: memref<16x64xbf16, #tpu.memory_space<vmem>>, %arg2: memref<64x128xbf16, #tpu.memory_space<vmem>>, %arg3: memref<1x128xf32, #tpu.memory_space<vmem>>, %arg4: memref<1x128xf32, #tpu.memory_space<vmem>>, %arg5: memref<1x128xf32, #tpu.memory_space<vmem>>, %arg6: memref<16x128xbf16, #tpu.memory_space<vmem>>) attributes {dimension_semantics = [#tpu.dimension_semantics<parallel>], iteration_bounds = array<i64: 2>, scalar_prefetch = 0 : i64, scratch_operands = 0 : i64, tpu.core_type = #tpu.core_type<tc>, window_params = [{transform_indices = @transform_0, window_bounds = array<i64: 16, 64>}, {pipeline_mode = #tpu.pipeline_mode<synchronous>, transform_indices = @transform_1, window_bounds = array<i64: 64, 128>}, {pipeline_mode = #tpu.pipeline_mode<synchronous>, transform_indices = @transform_2, window_bounds = array<i64: 1, 128>}, {pipeline_mode = #tpu.pipeline_mode<synchronous>, transform_indices = @transform_3, window_bounds = array<i64: 1, 128>}, {pipeline_mode = #tpu.pipeline_mode<synchronous>, transform_indices = @transform_4, window_bounds = array<i64: 1, 128>}, {transform_indices = @transform_5, window_bounds = array<i64: 16, 128>}]} {
    %c0 = arith.constant 0 : index
    %c0_0 = arith.constant 0 : index
    %0 = vector.load %arg1[%c0, %c0_0] : memref<16x64xbf16, #tpu.memory_space<vmem>>, vector<16x64xbf16>
    %c0_1 = arith.constant 0 : index
    %c0_2 = arith.constant 0 : index
    %1 = vector.load %arg2[%c0_1, %c0_2] : memref<64x128xbf16, #tpu.memory_space<vmem>>, vector<64x128xbf16>
    %cst = arith.constant dense<0.000000e+00> : vector<16x128xf32>
    %2 = tpu.matmul %0, %1, %cst {dimension_numbers = #tpu.dot_dimension_numbers<[1], [0], [0], [1], [0, 0, 1, 1], [], []>} : vector<16x64xbf16>, vector<64x128xbf16>, vector<16x128xf32> -> vector<16x128xf32>
    %c0_3 = arith.constant 0 : index
    %c0_4 = arith.constant 0 : index
    %3 = vector.load %arg3[%c0_3, %c0_4] : memref<1x128xf32, #tpu.memory_space<vmem>>, vector<1x128xf32>
    %4 = vector.broadcast %3 : vector<1x128xf32> to vector<16x128xf32>
    %5 = arith.addf %2, %4 : vector<16x128xf32>
    %cst_5 = arith.constant dense<0.000000e+00> : vector<16xf32>
    %6 = vector.multi_reduction <add>, %5, %cst_5 [1] : vector<16x128xf32> to vector<16xf32>
    %7 = vector.shape_cast %6 : vector<16xf32> to vector<16x1xf32>
    %cst_6 = arith.constant 1.280000e+02 : f32
    %8 = vector.broadcast %cst_6 : f32 to vector<16x1xf32>
    %9 = arith.divf %7, %8 : vector<16x1xf32>
    %10 = vector.broadcast %9 : vector<16x1xf32> to vector<16x128xf32>
    %11 = arith.subf %5, %10 : vector<16x128xf32>
    %12 = arith.mulf %11, %11 : vector<16x128xf32>
    %cst_7 = arith.constant dense<0.000000e+00> : vector<16xf32>
    %13 = vector.multi_reduction <add>, %12, %cst_7 [1] : vector<16x128xf32> to vector<16xf32>
    %14 = vector.shape_cast %13 : vector<16xf32> to vector<16x1xf32>
    %cst_8 = arith.constant 1.280000e+02 : f32
    %15 = vector.broadcast %cst_8 : f32 to vector<16x1xf32>
    %16 = arith.divf %14, %15 : vector<16x1xf32>
    %cst_9 = arith.constant 9.99999974E-6 : f32
    %17 = vector.broadcast %cst_9 : f32 to vector<16x1xf32>
    %18 = arith.addf %16, %17 : vector<16x1xf32>
    %19 = math.rsqrt %18 : vector<16x1xf32>
    %20 = vector.broadcast %19 : vector<16x1xf32> to vector<16x128xf32>
    %21 = arith.mulf %11, %20 : vector<16x128xf32>
    %c0_10 = arith.constant 0 : index
    %c0_11 = arith.constant 0 : index
    %22 = vector.load %arg4[%c0_10, %c0_11] : memref<1x128xf32, #tpu.memory_space<vmem>>, vector<1x128xf32>
    %23 = vector.broadcast %22 : vector<1x128xf32> to vector<16x128xf32>
    %24 = arith.mulf %21, %23 : vector<16x128xf32>
    %c0_12 = arith.constant 0 : index
    %c0_13 = arith.constant 0 : index
    %25 = vector.load %arg5[%c0_12, %c0_13] : memref<1x128xf32, #tpu.memory_space<vmem>>, vector<1x128xf32>
    %26 = vector.broadcast %25 : vector<1x128xf32> to vector<16x128xf32>
    %27 = arith.addf %24, %26 : vector<16x128xf32>
    %28 = arith.truncf %27 : vector<16x128xf32> to vector<16x128xbf16>
    %c0_14 = arith.constant 0 : index
    %c0_15 = arith.constant 0 : index
    %29 = vector.load %arg6[%c0_14, %c0_15] : memref<16x128xbf16, #tpu.memory_space<vmem>>, vector<16x128xbf16>
    tpu.vector_store %arg6[%c0_14, %c0_15], %28 {strides = array<i32>} : memref<16x128xbf16, #tpu.memory_space<vmem>>, vector<16x128xbf16>,
    return
  }
  func.func @transform_0(%arg0: i32) -> (i32, i32) {
    %c0_i32 = arith.constant 0 : i32
    %c0_i32_0 = arith.constant 0 : i32
    return %arg0, %c0_i32 : i32, i32
  }
  func.func @transform_1(%arg0: i32) -> (i32, i32) {
    %c0_i32 = arith.constant 0 : i32
    %c0_i32_0 = arith.constant 0 : i32
    %c0_i32_1 = arith.constant 0 : i32
    return %c0_i32, %c0_i32_0 : i32, i32
  }
  func.func @transform_2(%arg0: i32) -> (i32, i32) {
    %c0_i32 = arith.constant 0 : i32
    %c0_i32_0 = arith.constant 0 : i32
    %c0_i32_1 = arith.constant 0 : i32
    return %c0_i32, %c0_i32_0 : i32, i32
  }
  func.func @transform_3(%arg0: i32) -> (i32, i32) {
    %c0_i32 = arith.constant 0 : i32
    %c0_i32_0 = arith.constant 0 : i32
    %c0_i32_1 = arith.constant 0 : i32
    return %c0_i32, %c0_i32_0 : i32, i32
  }
  func.func @transform_4(%arg0: i32) -> (i32, i32) {
    %c0_i32 = arith.constant 0 : i32
    %c0_i32_0 = arith.constant 0 : i32
    %c0_i32_1 = arith.constant 0 : i32
    return %c0_i32, %c0_i32_0 : i32, i32
  }
  func.func @transform_5(%arg0: i32) -> (i32, i32) {
    %c0_i32 = arith.constant 0 : i32
    %c0_i32_0 = arith.constant 0 : i32
    return %arg0, %c0_i32 : i32, i32
  }
}

</mosaic_0001>

<llo_original>
// kernel: patch_embed_forward.1
$region0: #{patch_embed_forward.1}
  #allocation0 [shape = 'u32[]', space=smem, size = 0x4, offset = 0x4, fixed_abs, tag = 'smem constant byte address 0x4 - core index']
  #allocation1 [shape = 'u32[144,128]{1,0:T(1,128)}', space=vmem, size = 0x12000, scoped, tag = 'internal scratch']
  %s0 = inlined_call_operand.vmem [shape: bf16[32,64], index: 0, kind: input, shape index: {}]
  %s1 = inlined_call_operand.vmem [shape: bf16[64,128], index: 1, kind: input, shape index: {}]
  %s2 = inlined_call_operand.vmem [shape: f32[1,128], index: 2, kind: input, shape index: {}]
  %s3 = inlined_call_operand.vmem [shape: f32[1,128], index: 3, kind: input, shape index: {}]
  %s4 = inlined_call_operand.vmem [shape: f32[1,128], index: 4, kind: input, shape index: {}]
  %s5 = inlined_call_operand.hbm [shape: bf16[32,128], index: 5, kind: output, shape index: {}]
  %s6 = sld [smem:[#allocation0]]
  $region53: #{patch_embed_forward.1} parent=0
    _
  %s8 = ssub.s32 1, %s6
  %s9 = scalar_select 0, %s8, %s6
  $region1: #{patch_embed_forward.1} parent=0
    #allocation2 [shape = 'u8[8192]{0}', space=vmem, size = 0x2000, scoped, tag = 'output window, operand 0']
    #allocation3 [shape = 's32[2]{0}', space=sflag, size = 0x8, scoped, tag = 'scoped memory for patch_embed_forward.1']
    %10 = vsyncpa [#allocation3], 0
    %s11 = scalar_lea.sflag [#allocation3], 1
    %12 = vsyncpa %s11, 0
    loop: start=0, step=1, limit=4
    $region2: #{patch_embed_forward.1} parent=1 // loop_pre_header
      _
    $region3: #{patch_embed_forward.1} parent=1 // loop_header
      %s14 = sphi 0, %s18
      %p15 = scmp.ge.s32.totalorder %s14, 4
      %s24 = sphi 0, %s26
      %s27 = sphi 0, %s24
      %s28 = sphi 0, %s27
      %s44 = sphi 0, %s28
      %s48 = sphi 0, %s48
      %s50 = sphi 0, %s48
      %s51 = sphi 0, %s50
      %s65 = sphi 0, %s51
      %s69 = sphi 0, %s69
      %s71 = sphi 0, %s69
      %s72 = sphi 0, %s71
      %s86 = sphi 0, %s72
      %s90 = sphi 0, %s90
      %s92 = sphi 0, %s90
      %s93 = sphi 0, %s92
      %s107 = sphi 0, %s93
      %s111 = sphi 0, %s111
      %s113 = sphi 0, %s111
      %s114 = sphi 0, %s113
      %s128 = sphi 0, %s114
      %s134 = sphi 0, %s136
      %s137 = sphi 0, %s134
      %s138 = sphi 0, %s137
      %s154 = sphi 0, %s138
    $region4: #{patch_embed_forward.1} parent=1 // loop_header_branch
      %17 = sbr.rel (%p15) target = $region8
    $region5: #{patch_embed_forward.1} parent=1 // loop_body
      %s19 = ssub.s32 %s14, 1
      %s20 = ssub.s32 %s14, 2
      %s21 = sadd.s32 %s14, 1
      %s22 = ssub.s32 %s14, %s21
      %p23 = scmp.eq.s32.totalorder %s22, 0
      %s25 = sadd.s32 %s24, 1
      %s26 = scalar_select %p23, %s24, %s25
      %p29 = pneg %p23
      %p30 = scmp.eq.s32.totalorder %s14, 1
      %p31 = por %p29, %p30
      %p32 = scmp.ne.s32.totalorder %s24, %s27
      %p33 = scmp.eq.s32.totalorder %s14, 0
      %p34 = por %p32, %p33
      %p35 = scmp.ne.s32.totalorder %s24, %s27
      %p36 = scmp.eq.s32.totalorder %s19, 1
      %p37 = por %p35, %p36
      %p38 = scmp.ne.s32.totalorder %s27, %s28
      %p39 = scmp.eq.s32.totalorder %s19, 0
      %p40 = por %p38, %p39
      %p41 = scmp.ne.s32.totalorder %s27, %s28
      %p42 = scmp.eq.s32.totalorder %s20, 1
      %p43 = por %p41, %p42
      %p45 = scmp.ne.s32.totalorder %s28, %s44
      %p46 = scmp.eq.s32.totalorder %s20, 0
      %p47 = por %p45, %p46
      %s49 = sadd.s32 %s48, 1
      %p52 = scmp.eq.s32.totalorder %s14, 1
      %p53 = scmp.ne.s32.totalorder %s48, %s50
      %p54 = scmp.eq.s32.totalorder %s14, 0
      %p55 = por %p53, %p54
      %p56 = scmp.ne.s32.totalorder %s48, %s50
      %p57 = scmp.eq.s32.totalorder %s19, 1
      %p58 = por %p56, %p57
      %p59 = scmp.ne.s32.totalorder %s50, %s51
      %p60 = scmp.eq.s32.totalorder %s19, 0
      %p61 = por %p59, %p60
      %p62 = scmp.ne.s32.totalorder %s50, %s51
      %p63 = scmp.eq.s32.totalorder %s20, 1
      %p64 = por %p62, %p63
      %p66 = scmp.ne.s32.totalorder %s51, %s65
      %p67 = scmp.eq.s32.totalorder %s20, 0
      %p68 = por %p66, %p67
      %s70 = sadd.s32 %s69, 1
      %p73 = scmp.eq.s32.totalorder %s14, 1
      %p74 = scmp.ne.s32.totalorder %s69, %s71
      %p75 = scmp.eq.s32.totalorder %s14, 0
      %p76 = por %p74, %p75
      %p77 = scmp.ne.s32.totalorder %s69, %s71
      %p78 = scmp.eq.s32.totalorder %s19, 1
      %p79 = por %p77, %p78
      %p80 = scmp.ne.s32.totalorder %s71, %s72
      %p81 = scmp.eq.s32.totalorder %s19, 0
      %p82 = por %p80, %p81
      %p83 = scmp.ne.s32.totalorder %s71, %s72
      %p84 = scmp.eq.s32.totalorder %s20, 1
      %p85 = por %p83, %p84
      %p87 = scmp.ne.s32.totalorder %s72, %s86
      %p88 = scmp.eq.s32.totalorder %s20, 0
      %p89 = por %p87, %p88
      %s91 = sadd.s32 %s90, 1
      %p94 = scmp.eq.s32.totalorder %s14, 1
      %p95 = scmp.ne.s32.totalorder %s90, %s92
      %p96 = scmp.eq.s32.totalorder %s14, 0
      %p97 = por %p95, %p96
      %p98 = scmp.ne.s32.totalorder %s90, %s92
      %p99 = scmp.eq.s32.totalorder %s19, 1
      %p100 = por %p98, %p99
      %p101 = scmp.ne.s32.totalorder %s92, %s93
      %p102 = scmp.eq.s32.totalorder %s19, 0
      %p103 = por %p101, %p102
      %p104 = scmp.ne.s32.totalorder %s92, %s93
      %p105 = scmp.eq.s32.totalorder %s20, 1
      %p106 = por %p104, %p105
      %p108 = scmp.ne.s32.totalorder %s93, %s107
      %p109 = scmp.eq.s32.totalorder %s20, 0
      %p110 = por %p108, %p109
      %s112 = sadd.s32 %s111, 1
      %p115 = scmp.eq.s32.totalorder %s14, 1
      %p116 = scmp.ne.s32.totalorder %s111, %s113
      %p117 = scmp.eq.s32.totalorder %s14, 0
      %p118 = por %p116, %p117
      %p119 = scmp.ne.s32.totalorder %s111, %s113
      %p120 = scmp.eq.s32.totalorder %s19, 1
      %p121 = por %p119, %p120
      %p122 = scmp.ne.s32.totalorder %s113, %s114
      %p123 = scmp.eq.s32.totalorder %s19, 0
      %p124 = por %p122, %p123
      %p125 = scmp.ne.s32.totalorder %s113, %s114
      %p126 = scmp.eq.s32.totalorder %s20, 1
      %p127 = por %p125, %p126
      %p129 = scmp.ne.s32.totalorder %s114, %s128
      %p130 = scmp.eq.s32.totalorder %s20, 0
      %p131 = por %p129, %p130
      %s132 = ssub.s32 %s14, %s21
      %p133 = scmp.eq.s32.totalorder %s132, 0
      %s135 = sadd.s32 %s134, 1
      %s136 = scalar_select %p133, %s134, %s135
      %p139 = pneg %p133
      %p140 = scmp.eq.s32.totalorder %s14, 1
      %p141 = por %p139, %p140
      %p142 = scmp.ne.s32.totalorder %s134, %s137
      %p143 = scmp.eq.s32.totalorder %s14, 0
      %p144 = por %p142, %p143
      %p145 = scmp.ne.s32.totalorder %s134, %s137
      %p146 = scmp.eq.s32.totalorder %s19, 1
      %p147 = por %p145, %p146
      %p148 = scmp.ne.s32.totalorder %s137, %s138
      %p149 = scmp.eq.s32.totalorder %s19, 0
      %p150 = por %p148, %p149
      %p151 = scmp.ne.s32.totalorder %s137, %s138
      %p152 = scmp.eq.s32.totalorder %s20, 1
      %p153 = por %p151, %p152
      %p155 = scmp.ne.s32.totalorder %s138, %s154
      %p156 = scmp.eq.s32.totalorder %s20, 0
      %p157 = por %p155, %p156
      %p158 = scmp.le.s32.totalorder 1, %s14
      %p159 = scmp.lt.s32.totalorder %s14, 3
      %p160 = pnand %p158, %p159
      %p161 = pneg %p160
      // Predicated region
      $region9: #{patch_embed_forward.1} parent=5 // pred_check
        _
      $region10: #{patch_embed_forward.1} parent=5 // pred_check_branch
        %163 = sbr.rel (%p160) target = $region12
      $region11: #{patch_embed_forward.1} parent=5 // pred_region
        %s164 = ssub.s32 %s14, 1
        // Predicated region
        $region13: #{patch_embed_forward.1} parent=11 // pred_check
          %p165 = pneg %p61
        $region14: #{patch_embed_forward.1} parent=11 // pred_check_branch
          %167 = sbr.rel (%p165) target = $region16
        $region15: #{patch_embed_forward.1} parent=11 // pred_region
          _
        $region16: #{patch_embed_forward.1} parent=11 // pred_fallthru
          _
        // Predicated region
        $region17: #{patch_embed_forward.1} parent=11 // pred_check
          %p168 = pneg %p82
        $region18: #{patch_embed_forward.1} parent=11 // pred_check_branch
          %170 = sbr.rel (%p168) target = $region20
        $region19: #{patch_embed_forward.1} parent=11 // pred_region
          _
        $region20: #{patch_embed_forward.1} parent=11 // pred_fallthru
          _
        // Predicated region
        $region21: #{patch_embed_forward.1} parent=11 // pred_check
          %p171 = pneg %p103
        $region22: #{patch_embed_forward.1} parent=11 // pred_check_branch
          %173 = sbr.rel (%p171) target = $region24
        $region23: #{patch_embed_forward.1} parent=11 // pred_region
          _
        $region24: #{patch_embed_forward.1} parent=11 // pred_fallthru
          _
        // Predicated region
        $region25: #{patch_embed_forward.1} parent=11 // pred_check
          %p174 = pneg %p124
        $region26: #{patch_embed_forward.1} parent=11 // pred_check_branch
          %176 = sbr.rel (%p174) target = $region28
        $region27: #{patch_embed_forward.1} parent=11 // pred_region
          _
        $region28: #{patch_embed_forward.1} parent=11 // pred_fallthru
          _
      $region12: #{patch_embed_forward.1} parent=5 // pred_fallthru
        _
      %p177 = scmp.lt.s32.totalorder %s14, 2
      // Predicated region
      $region29: #{patch_embed_forward.1} parent=5 // pred_check
        %p178 = pneg %p177
      $region30: #{patch_embed_forward.1} parent=5 // pred_check_branch
        %180 = sbr.rel (%p178) target = $region32
      $region31: #{patch_embed_forward.1} parent=5 // pred_region
        // Predicated region
        $region33: #{patch_embed_forward.1} parent=31 // pred_check
          %p181 = pneg %p34
        $region34: #{patch_embed_forward.1} parent=31 // pred_check_branch
          %183 = sbr.rel (%p181) target = $region36
        $region35: #{patch_embed_forward.1} parent=31 // pred_region
          %s184 = smul.u32 2, %s14
          %p185 = scmp.lt.s32.totalorder %s184, 3
          %s186 = scalar_select %p185, %s184, 3
          %s187 = smul.addr %s186, 4
          %s188 = scalar_lea.vmem %s0, %s187
          %s189 = smul.u32 2, %s14
        $region36: #{patch_embed_forward.1} parent=31 // pred_fallthru
          _
      $region32: #{patch_embed_forward.1} parent=5 // pred_fallthru
        _
      %p190 = scmp.le.s32.totalorder 1, %s14
      %p191 = scmp.lt.s32.totalorder %s14, 3
      %p192 = pnand %p190, %p191
      %p193 = pneg %p192
      // Predicated region
      $region37: #{patch_embed_forward.1} parent=5 // pred_check
        _
      $region38: #{patch_embed_forward.1} parent=5 // pred_check_branch
        %195 = sbr.rel (%p192) target = $region40
      $region39: #{patch_embed_forward.1} parent=5 // pred_region
        %s196 = ssub.s32 %s14, 1
        %s197 = smul.u32 2, %s19
        %p198 = scmp.lt.s32.totalorder %s197, 3
        %s199 = scalar_select %p198, %s197, 3
        %s200 = smul.addr %s199, 4
        %s201 = scalar_lea.vmem %s0, %s200
        %p202 = pneg %p40
        %p203 = pneg %p37
        %p204 = pneg %p61
        %p205 = pneg %p58
        %p206 = pneg %p82
        %p207 = pneg %p79
        %p208 = pneg %p103
        %p209 = pneg %p100
        %p210 = pneg %p124
        %p211 = pneg %p121
        %p212 = pneg %p150
        %p213 = pneg %p147
        %s214 = sand.u32 %s137, 1
        %s215 = scalar_lea.sflag [#allocation3], %s214
        %s216 = sand.u32 %s137, 1
        %s217 = smul.addr %s216, 8
        %s218 = scalar_lea.vmem [#allocation2], %s217
        %s219 = smul.u32 2, %s19
        %p220 = scmp.lt.s32.totalorder %s219, 3
        %s221 = scalar_select %p220, %s219, 3
        %s222 = smul.addr %s221, 4
        %s223 = scalar_lea.vmem %s0, %s222
        %s224 = smul.u32 2, %s19
        %s225 = smul.u32 2, %s19
        %v227 = vld [vmem:[%s223] sm:$0xf]
        %v228 = vld [vmem:[%s223 + $0x4] sm:$0xf]
        %v229 = vld [vmem:[%s1] sm:$0xf]
        %v230 = vld [vmem:[%s1 + $0x4] sm:$0xf]
        %v231 = vld [vmem:[%s1 + $0x8] sm:$0xf]
        %v232 = vld [vmem:[%s1 + $0xc] sm:$0xf]
        %v233 = vld [vmem:[%s1 + $0x10] sm:$0xf]
        %v234 = vld [vmem:[%s1 + $0x14] sm:$0xf]
        %v235 = vld [vmem:[%s1 + $0x18] sm:$0xf]
        %v236 = vld [vmem:[%s1 + $0x1c] sm:$0xf]
        %v237 = vld [vmem:[%s2] sm:$0x1]
        %v239 = vlaneseq
        %v240 = vshrl.u32 %v239, 7
        %v241 = vsub.s32 0, %v240
        %v242 = vrot.slane %v237, %v241
        %v246 = vunpack.c.l.b16 %v227
        %v247 = vunpack.c.l.b16 %v228
        %v248 = vpack.c.b16 %v247, %v246
        %v257 = vunpack.c.l.b16 %v229
        %v258 = vunpack.c.l.b16 %v230
        %v259 = vunpack.c.l.b16 %v231
        %v260 = vunpack.c.l.b16 %v232
        %v261 = vunpack.c.l.b16 %v233
        %v262 = vunpack.c.l.b16 %v234
        %v263 = vunpack.c.l.b16 %v235
        %v264 = vunpack.c.l.b16 %v236
        %v265 = vpack.c.b16 %v258, %v257
        %v266 = vpack.c.b16 %v260, %v259
        %v267 = vpack.c.b16 %v262, %v261
        %v268 = vpack.c.b16 %v264, %v263
        %vm273 = vcmask 523264
        %v275 = vsel %vm273, %v248, 0
        %277 = vmatprep.subr.bf16.mxu0 0
        %278 = vmatpush1.bf16.msra.mxu0 %v265
        %279 = vmatprep.subr.bf16.mxu0 0
        %280 = vmatpush1.bf16.msra.mxu0 %v266
        %281 = vmatprep.subr.bf16.mxu0 0
        %282 = vmatpush1.bf16.msra.mxu0 %v267
        %283 = vmatprep.subr.bf16.mxu0 0
        %284 = vmatpush1.bf16.msra.mxu0 %v268
        %285 = vmatprep.subr.bf16.mxu0 0
        %286 = vmatpush1.bf16.msra.mxu0 0
        %287 = vmatprep.subr.bf16.mxu0 0
        %288 = vmatpush1.bf16.msra.mxu0 0
        %289 = vmatprep.subr.bf16.mxu0 0
        %290 = vmatpush1.bf16.msra.mxu0 0
        %291 = vmatprep.subr.bf16.mxu0 0
        %292 = vmatpush1.bf16.msra.mxu0 0
        %293 = vmatprep.subr.bf16.mxu0 0
        %294 = vmatpush1.bf16.msra.mxu0 0
        %295 = vmatprep.subr.bf16.mxu0 0
        %296 = vmatpush1.bf16.msra.mxu0 0
        %297 = vmatprep.subr.bf16.mxu0 0
        %298 = vmatpush1.bf16.msra.mxu0 0
        %299 = vmatprep.subr.bf16.mxu0 0
        %300 = vmatpush1.bf16.msra.mxu0 0
        %301 = vmatprep.subr.bf16.mxu0 0
        %302 = vmatpush1.bf16.msra.mxu0 0
        %303 = vmatprep.subr.bf16.mxu0 0
        %304 = vmatpush1.bf16.msra.mxu0 0
        %305 = vmatprep.subr.bf16.mxu0 0
        %306 = vmatpush1.bf16.msra.mxu0 0
        %307 = vmatprep.subr.bf16.mxu0 0
        %308 = vmatpush1.bf16.msra.mxu0 0
        %309 = vmatprep.mubr.bf16.mxu0 0
        %310 = vmatmul.mubr.bf16.gmra.mrb[0].mxu0 %v275
        %v311 = vpop.f32.mrb[0].mxu0
        %v312 = vadd.f32 %v242, %v311
        %v313 = vpop.f32.mrb[0].mxu0
        %v314 = vpop.f32.mrb[0].mxu0
        %v315 = vadd.f32 %v242, %v314
        %v316 = vpop.f32.mrb[0].mxu0
        %317 = vdwg.mxu0
        %318 = vadd.xlane.f32.xlu0 %v312
        %v319 = vpop.xlane.xlu0 %318
        %320 = vadd.xlane.f32.xlu0 %v315
        %v321 = vpop.xlane.xlu0 %320
        %v322 = vrcp.pop 128.0
        %v323 = vmul.f32 %v319, %v322
        %v324 = vmul.f32 %v321, %v322
        %v325 = vsub.f32 %v312, %v323
        %v326 = vsub.f32 %v315, %v324
        %v327 = vmul.f32 %v325, %v325
        %v328 = vmul.f32 %v326, %v326
        %329 = vadd.xlane.f32.xlu0 %v327
        %v330 = vpop.xlane.xlu0 %329
        %331 = vadd.xlane.f32.xlu0 %v328
        %v332 = vpop.xlane.xlu0 %331
        %v333 = vmul.f32 %v330, %v322
        %v334 = vmul.f32 %v332, %v322
        %v335 = vadd.f32 %v333, 1e-05
        %v336 = vadd.f32 %v334, 1e-05
        %v337 = vrsqrt.pop %v335
        %v338 = vrsqrt.pop %v336
        %v339 = vmul.f32 %v325, %v337
        %v340 = vmul.f32 %v326, %v338
        %v341 = vld [vmem:[%s3] sm:$0x1]
        %v343 = vlaneseq
        %v344 = vshrl.u32 %v343, 7
        %v345 = vsub.s32 0, %v344
        %v346 = vrot.slane %v341, %v345
        %v348 = vmul.f32 %v339, %v346
        %v349 = vmul.f32 %v340, %v346
        %v350 = vld [vmem:[%s4] sm:$0x1]
        %v352 = vlaneseq
        %v353 = vshrl.u32 %v352, 7
        %v354 = vsub.s32 0, %v353
        %v355 = vrot.slane %v350, %v354
        %v357 = vadd.f32 %v348, %v355
        %v358 = vadd.f32 %v349, %v355
        %v359 = vpack.c.bf16 %v358, %v357
        %v361 = vunpack.c.l.b16 %v359
        %v362 = vunpack.c.h.b16 %v359
        %v363 = vpack.c.b16 %v361, %v361
        %v364 = vpack.c.b16 %v362, %v362
        %367 = vst [vmem:[%s218] sm:$0xf] %v363
        %368 = vst [vmem:[%s218 + $0x4] sm:$0xf] %v364
        %s369 = sand.u32 %s137, 1
        %s370 = scalar_lea.sflag [#allocation3], %s369
        %s371 = sand.u32 %s137, 1
        %s372 = smul.addr %s371, 8
        %s373 = scalar_lea.vmem [#allocation2], %s372
        // Predicated region
        $region41: #{patch_embed_forward.1} parent=39 // pred_check
          %p374 = pneg %p147
        $region42: #{patch_embed_forward.1} parent=39 // pred_check_branch
          %376 = sbr.rel (%p374) target = $region44
        $region43: #{patch_embed_forward.1} parent=39 // pred_region
          %s377 = smul.u32 2, %s19
          %s379 = ssub.s32 128, 128
          %380 = vsyncadd %s370, %s379
          %s381 = smul.addr %s377, 64
          %s382 = scalar_lea.hbm %s5, %s381
          %s383 = sshll.u32 %s373, 4
          %s384 = int_to_ptr.vmem [resolvable:$true] %s383
          %389 = dma.vmem_to_hbm [thread:$0]  %s384, 128, %s382, %s370, 64, 64, 4
        $region44: #{patch_embed_forward.1} parent=39 // pred_fallthru
          _
      $region40: #{patch_embed_forward.1} parent=5 // pred_fallthru
        _
      %p390 = scmp.le.s32.totalorder 2, %s14
      // Predicated region
      $region45: #{patch_embed_forward.1} parent=5 // pred_check
        %p391 = pneg %p390
      $region46: #{patch_embed_forward.1} parent=5 // pred_check_branch
        %393 = sbr.rel (%p391) target = $region48
      $region47: #{patch_embed_forward.1} parent=5 // pred_region
        %s394 = ssub.s32 %s14, 2
        // Predicated region
        $region49: #{patch_embed_forward.1} parent=47 // pred_check
          %p395 = pneg %p153
        $region50: #{patch_embed_forward.1} parent=47 // pred_check_branch
          %397 = sbr.rel (%p395) target = $region52
        $region51: #{patch_embed_forward.1} parent=47 // pred_region
          %s398 = sand.u32 %s138, 1
          %s399 = scalar_lea.sflag [#allocation3], %s398
          %s400 = sand.u32 %s138, 1
          %s401 = smul.addr %s400, 8
          %s402 = scalar_lea.vmem [#allocation2], %s401
          %403 = dma.done %s399, 128
        $region52: #{patch_embed_forward.1} parent=47 // pred_fallthru
          _
      $region48: #{patch_embed_forward.1} parent=5 // pred_fallthru
        _
    $region6: #{patch_embed_forward.1} parent=1 // loop_footer
      %s18 = sadd.s32 1, %s14
    $region7: #{patch_embed_forward.1} parent=1 // loop_footer_branch
      %13 = sbr.rel target = $region3
    $region8: #{patch_embed_forward.1} parent=1 // loop_exit
      _
    %404 = vsyncpa [#allocation3], 1
    %s405 = scalar_lea.sflag [#allocation3], 1
    %406 = vsyncpa %s405, 1

</llo_original>
